<compile_context>
chip_gen: v5e
topology: v5e:2x2
jax: 0.10.0
libtpu: 0.0.40
codegen_flags: <defaults>
</compile_context>

<pallas_src>
import functools
import math

import jax
import jax.numpy as jnp
from jax import lax
from jax.experimental import pallas as pl
from jax.experimental.pallas import tpu as pltpu

IN_FEATURES = 3
HIDDEN = 50


def _mlp_kernel(x_ref, w1_ref, b1_ref, w2c_ref, b2_ref, o_ref, *, chunk, use_bf16_tanh):
    # x_ref : (3, TB)   batch tile on the lane axis
    # w1_ref: (50, 3)   b1_ref: (50, 1)
    # w2c_ref: (50, 1)  second layer as a column -> VPU mul + sublane reduce (no MXU)
    # b2_ref: (1, 1)    scalar in SMEM
    # o_ref : (1, TB)
    n_chunks = x_ref.shape[1] // chunk

    w1 = w1_ref[...]
    b1 = b1_ref[...]
    w2c = w2c_ref[...]
    b2 = b2_ref[0, 0]

    def one_chunk(start):
        x = x_ref[:, pl.ds(start, chunk)]                                   # (3, chunk)
        pre = (
            jnp.dot(w1, x, preferred_element_type=jnp.float32,
                    precision=jax.lax.Precision.HIGHEST)
            + b1
        )                                                                   # (50, chunk)
        if use_bf16_tanh:
            # v6e/v7x only: bf16 EUP ~2x transcendental throughput (looser tolerance).
            h = jnp.tanh(pre.astype(jnp.bfloat16)).astype(jnp.float32)
        else:
            h = jnp.tanh(pre)
        # (1,50)@(50,chunk) replaced with VPU multiply + sublane reduction: the MXU
        # stays free and this runs in slots idle while the EUP (tanh) is saturated.
        y = jnp.sum(w2c * h, axis=0, keepdims=True) + b2                    # (1, chunk)
        o_ref[:, pl.ds(start, chunk)] = jax.nn.sigmoid(y).astype(o_ref.dtype)

    if n_chunks == 1:
        one_chunk(0)
    else:
        def body(c, carry):
            one_chunk(pl.multiple_of(c * chunk, chunk))
            return carry

        lax.fori_loop(0, n_chunks, body, 0, unroll=bool(n_chunks <= 8))


def mlp_forward_xt(xt, w1, b1, w2, b2, *, tb=32768, chunk=1024, use_bf16_tanh=False):
    """Core entry point. xt is (3, B): batch already on the lane axis."""
    F, B = xt.shape
    assert F == IN_FEATURES and w1.shape == (HIDDEN, IN_FEATURES)
    assert b1.shape == (HIDDEN, 1) and w2.shape == (1, HIDDEN)

    lanes = 128
    pb_min = pl.cdiv(B, lanes) * lanes                     # min padded batch
    tb = max(lanes, (tb // lanes) * lanes)                 # multiple of 128 lanes
    tb = min(tb, pb_min)                                   # no bigger than needed
    if pb_min >= 2 * lanes and tb > pb_min // 2:
        # v7x: guarantee >= 2 grid steps so both TensorCores get work.
        tb = max(lanes, (pb_min // (2 * lanes)) * lanes)
    # Rebalance the tile so padding waste is minimal at a fixed step count.
    n_steps = pl.cdiv(pb_min, tb)
    tb = pl.cdiv(pl.cdiv(pb_min, n_steps), lanes) * lanes
    pb = n_steps * tb
    grid = (pb // tb,)

    # In-kernel chunk: multiple of 128, divides tb.
    chunk = max(lanes, (min(chunk, tb) // lanes) * lanes)
    chunk = lanes * math.gcd(tb // lanes, chunk // lanes)

    if pb != B:
        xt = jnp.pad(xt, ((0, 0), (0, pb - B)))            # padded tail sliced off later

    w2c = w2.T                                             # (50, 1) column
    b2s = jnp.asarray(b2, jnp.float32).reshape(1, 1)

    kernel = functools.partial(_mlp_kernel, chunk=chunk, use_bf16_tanh=use_bf16_tanh)

    out = pl.pallas_call(
        kernel,
        out_shape=jax.ShapeDtypeStruct((1, pb), xt.dtype),
        grid=grid,
        in_specs=[
            pl.BlockSpec((IN_FEATURES, tb), lambda i: (0, i)),      # x tile, streamed
            pl.BlockSpec((HIDDEN, IN_FEATURES), lambda i: (0, 0)),  # W1, VMEM-resident
            pl.BlockSpec((HIDDEN, 1), lambda i: (0, 0)),            # b1, VMEM-resident
            pl.BlockSpec((HIDDEN, 1), lambda i: (0, 0)),            # w2 col, resident
            pl.BlockSpec(memory_space=pltpu.MemorySpace.SMEM),      # b2 scalar
        ],
        out_specs=pl.BlockSpec((1, tb), lambda i: (0, i)),          # lane-dense output
        compiler_params=pltpu.CompilerParams(
            dimension_semantics=("parallel",),     # shard batch grid across TCs (v7x)
        ),
        cost_estimate=pl.CostEstimate(
            flops=450 * pb,                # ~300 (W1) + 50 (b1) + 100 (W2 reduce)
            transcendentals=52 * pb,       # 50 tanh + sigmoid
            bytes_accessed=16 * pb,        # 3 f32 in + 1 f32 out per element
        ),
    )(xt, w1, b1, w2c, b2s)
    return out                                              # (1, pb)


def mlp_forward(x, w1, b1, w2, b2, **kw):
    """Convenience wrapper matching the PyTorch layout: x (B, 3) -> (B, 1)."""
    B = x.shape[0]
    # TODO(synk): at production batch sizes the producer should emit x directly in
    # (3, B) layout (use mlp_forward_xt) so this extra HBM transpose pass disappears.
    xt = x.T                                                 # (3, B)
    out = mlp_forward_xt(xt, w1, b1, w2, b2, **kw)           # (1, pb)
    return out[0, :B][:, None]                               # back to (B, 1)


def init_params():
    # PyTorch nn.Linear layout: weight is (out_features, in_features).
    k = jax.random.PRNGKey(0)
    k1, k2, k3, k4 = jax.random.split(k, 4)
    w1 = jax.random.uniform(k1, (HIDDEN, IN_FEATURES), jnp.float32, -0.5, 0.5)
    b1 = jax.random.uniform(k2, (HIDDEN, 1), jnp.float32, -0.5, 0.5)
    w2 = jax.random.uniform(k3, (1, HIDDEN), jnp.float32, -0.5, 0.5)
    b2 = jax.random.uniform(k4, (1, 1), jnp.float32, -0.5, 0.5)
    return w1, b1, w2, b2


def _reference(x, w1, b1, w2, b2):
    return jax.nn.sigmoid(jnp.tanh(x @ w1.T + b1.T) @ w2.T + b2)


if __name__ == "__main__":
    key = jax.random.PRNGKey(0)
    w1, b1, w2, b2 = init_params()

    # Small batch (single grid step, single chunk).
    x_small = jax.random.normal(key, (8, IN_FEATURES), jnp.float32)
    out_small = jax.block_until_ready(mlp_forward(x_small, w1, b1, w2, b2))
    ref_small = _reference(x_small, w1, b1, w2, b2)
    assert out_small.shape == (8, 1)
    assert jnp.allclose(out_small, ref_small, atol=1e-5), "mismatch vs reference (B=8)"

    # Mid batch: exercises the multi-step grid ("parallel" axis) and padded tail.
    x_mid = jax.random.normal(jax.random.PRNGKey(1), (300, IN_FEATURES), jnp.float32)
    out_mid = jax.block_until_ready(mlp_forward(x_mid, w1, b1, w2, b2))
    ref_mid = _reference(x_mid, w1, b1, w2, b2)
    assert out_mid.shape == (300, 1)
    assert jnp.allclose(out_mid, ref_mid, atol=1e-5), "mismatch vs reference (B=300)"

    print("KERNEL_OK")
</pallas_src>

<mosaic_0001>
module attributes {stable_mosaic.version = 11 : i64} {
  func.func @_mlp_kernel(%arg0: i32, %arg1: memref<3x128xf32, #tpu.memory_space<vmem>>, %arg2: memref<50x3xf32, #tpu.memory_space<vmem>>, %arg3: memref<50x1xf32, #tpu.memory_space<vmem>>, %arg4: memref<50x1xf32, #tpu.memory_space<vmem>>, %arg5: memref<1x1xf32, #tpu.memory_space<smem>>, %arg6: memref<1x128xf32, #tpu.memory_space<vmem>>) attributes {dimension_semantics = [#tpu.dimension_semantics<parallel>], iteration_bounds = array<i64: 1>, scalar_prefetch = 0 : i64, scratch_operands = 0 : i64, tpu.core_type = #tpu.core_type<tc>, window_params = [{transform_indices = @transform_0, window_bounds = array<i64: 3, 128>}, {pipeline_mode = #tpu.pipeline_mode<synchronous>, transform_indices = @transform_1, window_bounds = array<i64: 50, 3>}, {pipeline_mode = #tpu.pipeline_mode<synchronous>, transform_indices = @transform_2, window_bounds = array<i64: 50, 1>}, {pipeline_mode = #tpu.pipeline_mode<synchronous>, transform_indices = @transform_3, window_bounds = array<i64: 50, 1>}, {transform_indices = @transform_4, window_bounds = array<i64: 1, 1>}, {transform_indices = @transform_5, window_bounds = array<i64: 1, 128>}]} {
    %c0 = arith.constant 0 : index
    %c0_0 = arith.constant 0 : index
    %0 = vector.load %arg2[%c0, %c0_0] : memref<50x3xf32, #tpu.memory_space<vmem>>, vector<50x3xf32>
    %c0_1 = arith.constant 0 : index
    %c0_2 = arith.constant 0 : index
    %1 = vector.load %arg3[%c0_1, %c0_2] : memref<50x1xf32, #tpu.memory_space<vmem>>, vector<50x1xf32>
    %c0_3 = arith.constant 0 : index
    %c0_4 = arith.constant 0 : index
    %2 = vector.load %arg4[%c0_3, %c0_4] : memref<50x1xf32, #tpu.memory_space<vmem>>, vector<50x1xf32>
    %c0_5 = arith.constant 0 : index
    %c0_6 = arith.constant 0 : index
    %3 = memref.load %arg5[%c0_5, %c0_6] : memref<1x1xf32, #tpu.memory_space<smem>>
    %c0_7 = arith.constant 0 : index
    %c0_8 = arith.constant 0 : index
    %4 = vector.load %arg1[%c0_7, %c0_8] : memref<3x128xf32, #tpu.memory_space<vmem>>, vector<3x128xf32>
    %cst = arith.constant dense<0.000000e+00> : vector<50x128xf32>
    %5 = tpu.matmul %0, %4, %cst {dimension_numbers = #tpu.dot_dimension_numbers<[1], [0], [0], [1], [0, 0, 1, 1], [], []>, precision = #tpu.contract_precision<fp32>} : vector<50x3xf32>, vector<3x128xf32>, vector<50x128xf32> -> vector<50x128xf32>
    %6 = vector.broadcast %1 : vector<50x1xf32> to vector<50x128xf32>
    %7 = arith.addf %5, %6 : vector<50x128xf32>
    %8 = math.tanh %7 : vector<50x128xf32>
    %9 = vector.broadcast %2 : vector<50x1xf32> to vector<50x128xf32>
    %10 = arith.mulf %9, %8 : vector<50x128xf32>
    %cst_9 = arith.constant dense<0.000000e+00> : vector<128xf32>
    %11 = vector.multi_reduction <add>, %10, %cst_9 [0] : vector<50x128xf32> to vector<128xf32>
    %12 = vector.shape_cast %11 : vector<128xf32> to vector<1x128xf32>
    %13 = vector.broadcast %3 : f32 to vector<1x128xf32>
    %14 = arith.addf %12, %13 : vector<1x128xf32>
    %15 = arith.negf %14 : vector<1x128xf32>
    %16 = math.exp %15 : vector<1x128xf32>
    %cst_10 = arith.constant 1.000000e+00 : f32
    %17 = vector.broadcast %cst_10 : f32 to vector<1x128xf32>
    %18 = arith.addf %17, %16 : vector<1x128xf32>
    %19 = arith.divf %17, %18 : vector<1x128xf32>
    %c0_11 = arith.constant 0 : index
    %c0_12 = arith.constant 0 : index
    %20 = vector.load %arg6[%c0_11, %c0_12] : memref<1x128xf32, #tpu.memory_space<vmem>>, vector<1x128xf32>
    tpu.vector_store %arg6[%c0_11, %c0_12], %19 {strides = array<i32>} : memref<1x128xf32, #tpu.memory_space<vmem>>, vector<1x128xf32>,
    return
  }
  func.func @transform_0(%arg0: i32) -> (i32, i32) {
    %c0_i32 = arith.constant 0 : i32
    %c0_i32_0 = arith.constant 0 : i32
    return %c0_i32, %arg0 : i32, i32
  }
  func.func @transform_1(%arg0: i32) -> (i32, i32) {
    %c0_i32 = arith.constant 0 : i32
    %c0_i32_0 = arith.constant 0 : i32
    %c0_i32_1 = arith.constant 0 : i32
    return %c0_i32, %c0_i32_0 : i32, i32
  }
  func.func @transform_2(%arg0: i32) -> (i32, i32) {
    %c0_i32 = arith.constant 0 : i32
    %c0_i32_0 = arith.constant 0 : i32
    %c0_i32_1 = arith.constant 0 : i32
    return %c0_i32, %c0_i32_0 : i32, i32
  }
  func.func @transform_3(%arg0: i32) -> (i32, i32) {
    %c0_i32 = arith.constant 0 : i32
    %c0_i32_0 = arith.constant 0 : i32
    %c0_i32_1 = arith.constant 0 : i32
    return %c0_i32, %c0_i32_0 : i32, i32
  }
  func.func @transform_4(%arg0: i32) -> (i32, i32) {
    %c0_i32 = arith.constant 0 : i32
    %c0_i32_0 = arith.constant 0 : i32
    %c0_i32_1 = arith.constant 0 : i32
    return %c0_i32, %c0_i32_0 : i32, i32
  }
  func.func @transform_5(%arg0: i32) -> (i32, i32) {
    %c0_i32 = arith.constant 0 : i32
    %c0_i32_0 = arith.constant 0 : i32
    return %c0_i32, %arg0 : i32, i32
  }
}

</mosaic_0001>

<llo_original>
// kernel: tpu_custom_call.1
$region0: #{tpu_custom_call.1}
  #allocation0 [shape = 'u32[]', space=smem, size = 0x4, offset = 0x4, fixed_abs, tag = 'smem constant byte address 0x4 - core index']
  #allocation1 [shape = 'u32[72,128]{1,0:T(1,128)}', space=vmem, size = 0x9000, scoped, tag = 'internal scratch']
  #allocation2 [shape = 'f32[1,1]{1,0:T(1,128)S(6)}', space=smem, size = 0x200, scoped, tag = 'scoped memory for tpu_custom_call.1']
  %s0 = inlined_call_operand.vmem [shape: f32[3,128], index: 0, kind: input, shape index: {}]
  %s1 = inlined_call_operand.vmem [shape: f32[50,3], index: 1, kind: input, shape index: {}]
  %s2 = inlined_call_operand.vmem [shape: f32[50,1], index: 2, kind: input, shape index: {}]
  %s3 = inlined_call_operand.vmem [shape: f32[50,1], index: 3, kind: input, shape index: {}]
  %s4 = inlined_call_operand.<no memory space> [shape: f32[1,1], index: 4, kind: input, shape index: {}]
  %s5 = inlined_call_operand.hbm [shape: f32[1,128], index: 5, kind: output, shape index: {}]
  %s6 = sld [smem:[#allocation0]]
  $region30: #{tpu_custom_call.1} parent=0
    _
  %s8 = ssub.s32 1, %s6
  %s9 = scalar_select 0, %s8, %s6
  %10 = sst [smem:[#allocation2]] %s4
  $region1: #{tpu_custom_call.1} parent=0
    #allocation3 [shape = 'u8[512]{0}', space=vmem, size = 0x400, scoped, tag = 'output window, operand 0, single buffered']
    #allocation4 [shape = 's32[1]{0}', space=sflag, size = 0x4, scoped, tag = 'scoped memory for tpu_custom_call.1']
    %11 = vsyncpa [#allocation4], 0
    // Predicated region
    $region2: #{tpu_custom_call.1} parent=1 // pred_check
      _
    $region3: #{tpu_custom_call.1} parent=1 // pred_check_branch
      %13 = sbr.rel (0) target = $region5
    $region4: #{tpu_custom_call.1} parent=1 // pred_region
      _
    $region5: #{tpu_custom_call.1} parent=1 // pred_fallthru
      _
    // Predicated region
    $region6: #{tpu_custom_call.1} parent=1 // pred_check
      _
    $region7: #{tpu_custom_call.1} parent=1 // pred_check_branch
      %15 = sbr.rel (0) target = $region9
    $region8: #{tpu_custom_call.1} parent=1 // pred_region
      _
    $region9: #{tpu_custom_call.1} parent=1 // pred_fallthru
      _
    // Predicated region
    $region10: #{tpu_custom_call.1} parent=1 // pred_check
      _
    $region11: #{tpu_custom_call.1} parent=1 // pred_check_branch
      %17 = sbr.rel (0) target = $region13
    $region12: #{tpu_custom_call.1} parent=1 // pred_region
      _
    $region13: #{tpu_custom_call.1} parent=1 // pred_fallthru
      _
    // Predicated region
    $region14: #{tpu_custom_call.1} parent=1 // pred_check
      _
    $region15: #{tpu_custom_call.1} parent=1 // pred_check_branch
      %19 = sbr.rel (0) target = $region17
    $region16: #{tpu_custom_call.1} parent=1 // pred_region
      _
    $region17: #{tpu_custom_call.1} parent=1 // pred_fallthru
      _
    // Predicated region
    $region18: #{tpu_custom_call.1} parent=1 // pred_check
      _
    $region19: #{tpu_custom_call.1} parent=1 // pred_check_branch
      %21 = sbr.rel (0) target = $region21
    $region20: #{tpu_custom_call.1} parent=1 // pred_region
      _
    $region21: #{tpu_custom_call.1} parent=1 // pred_fallthru
      _
    %v22 = vld [vmem:[%s1] sm:$0xff]
    %v23 = vld [vmem:[%s1 + $0x8] sm:$0xff]
    %v24 = vld [vmem:[%s1 + $0x10] sm:$0xff]
    %v25 = vld [vmem:[%s1 + $0x18] sm:$0xff]
    %v26 = vld [vmem:[%s1 + $0x20] sm:$0xff]
    %v27 = vld [vmem:[%s1 + $0x28] sm:$0xff]
    %v28 = vld [vmem:[%s1 + $0x30] sm:$0x3]
    %v29 = vld [vmem:[%s2] sm:$0xff]
    %v30 = vld [vmem:[%s2 + $0x8] sm:$0xff]
    %v31 = vld [vmem:[%s2 + $0x10] sm:$0xff]
    %v32 = vld [vmem:[%s2 + $0x18] sm:$0xff]
    %v33 = vld [vmem:[%s2 + $0x20] sm:$0xff]
    %v34 = vld [vmem:[%s2 + $0x28] sm:$0xff]
    %v35 = vld [vmem:[%s2 + $0x30] sm:$0x3]
    %v36 = vld [vmem:[%s3] sm:$0xff]
    %v37 = vld [vmem:[%s3 + $0x8] sm:$0xff]
    %v38 = vld [vmem:[%s3 + $0x10] sm:$0xff]
    %v39 = vld [vmem:[%s3 + $0x18] sm:$0xff]
    %v40 = vld [vmem:[%s3 + $0x20] sm:$0xff]
    %v41 = vld [vmem:[%s3 + $0x28] sm:$0xff]
    %v42 = vld [vmem:[%s3 + $0x30] sm:$0x3]
    %s43 = sld [smem:[#allocation2]]
    %v44 = vld [vmem:[%s0] sm:$0x7]
    %46 = vset.pattern.permute.xlu0 0
    %47 = vperm.xlu0 %46, %v29
    %v48 = vpop.permute.xlu0 %47
    %51 = vset.pattern.permute.xlu0 0
    %52 = vperm.xlu0 %51, %v30
    %v53 = vpop.permute.xlu0 %52
    %56 = vset.pattern.permute.xlu0 0
    %57 = vperm.xlu0 %56, %v31
    %v58 = vpop.permute.xlu0 %57
    %61 = vset.pattern.permute.xlu0 0
    %62 = vperm.xlu0 %61, %v32
    %v63 = vpop.permute.xlu0 %62
    %66 = vset.pattern.permute.xlu0 0
    %67 = vperm.xlu0 %66, %v33
    %v68 = vpop.permute.xlu0 %67
    %71 = vset.pattern.permute.xlu0 0
    %72 = vperm.xlu0 %71, %v34
    %v73 = vpop.permute.xlu0 %72
    %76 = vset.pattern.permute.xlu0 0
    %77 = vperm.xlu0 %76, %v35
    %v78 = vpop.permute.xlu0 %77
    %vm80 = vcmask 23552
    %v82 = vsel %vm80, %v22, 0
    %v85 = vsel %vm80, %v23, 0
    %v88 = vsel %vm80, %v24, 0
    %v91 = vsel %vm80, %v25, 0
    %v94 = vsel %vm80, %v26, 0
    %v97 = vsel %vm80, %v27, 0
    %v100 = vsel %vm80, %v28, 0
    %vm102 = vcmask 1042432
    %v104 = vsel %vm102, %v44, 0
    %106 = vmatpush.msra.mxu0 0.0
    %107 = vmatpush.msra.mxu0 0.0
    %108 = vmatpush.msra.mxu0 0.0
    %109 = vmatpush.msra.mxu0 0.0
    %110 = vmatpush.msra.mxu0 0.0
    %111 = vmatpush.msra.mxu0 0.0
    %112 = vmatpush.msra.mxu0 0.0
    %113 = vmatpush.msra.mxu0 0.0
    %114 = vmatpush.msra.mxu0 0.0
    %115 = vmatpush.msra.mxu0 0.0
    %116 = vmatpush.msra.mxu0 0.0
    %117 = vmatpush.msra.mxu0 0.0
    %118 = vmatpush.msra.mxu0 0.0
    %119 = vmatpush.msra.mxu0 0.0
    %120 = vmatpush.msra.mxu0 0.0
    %v121 = vand.u32 %v104, 4294901760
    %122 = vmatpush.msra.mxu0 %v121
    %v123 = vand.u32 %v82, 4294901760
    %v124 = vsub.f32 %v82, %v123
    %v125 = vand.u32 %v124, 4294901760
    %v126 = vsub.f32 %v124, %v125
    %v127 = vand.u32 %v126, 4294901760
    %128 = vmatmul.f32.gmra.mxu0 %v127
    %v129 = vpop.f32.mrf.mxu0
    %v130 = vadd.f32 %v48, %v129
    %v131 = vand.u32 %v85, 4294901760
    %v132 = vsub.f32 %v85, %v131
    %v133 = vand.u32 %v132, 4294901760
    %v134 = vsub.f32 %v132, %v133
    %v135 = vand.u32 %v134, 4294901760
    %136 = vmatmul.f32.gmra.mxu0 %v135
    %v137 = vpop.f32.mrf.mxu0
    %v138 = vadd.f32 %v53, %v137
    %v139 = vand.u32 %v88, 4294901760
    %v140 = vsub.f32 %v88, %v139
    %v141 = vand.u32 %v140, 4294901760
    %v142 = vsub.f32 %v140, %v141
    %v143 = vand.u32 %v142, 4294901760
    %144 = vmatmul.f32.gmra.mxu0 %v143
    %v145 = vpop.f32.mrf.mxu0
    %v146 = vadd.f32 %v58, %v145
    %v147 = vand.u32 %v91, 4294901760
    %v148 = vsub.f32 %v91, %v147
    %v149 = vand.u32 %v148, 4294901760
    %v150 = vsub.f32 %v148, %v149
    %v151 = vand.u32 %v150, 4294901760
    %152 = vmatmul.f32.gmra.mxu0 %v151
    %v153 = vpop.f32.mrf.mxu0
    %v154 = vadd.f32 %v63, %v153
    %v155 = vand.u32 %v94, 4294901760
    %v156 = vsub.f32 %v94, %v155
    %v157 = vand.u32 %v156, 4294901760
    %v158 = vsub.f32 %v156, %v157
    %v159 = vand.u32 %v158, 4294901760
    %160 = vmatmul.f32.gmra.mxu0 %v159
    %v161 = vpop.f32.mrf.mxu0
    %v162 = vadd.f32 %v68, %v161
    %v163 = vand.u32 %v97, 4294901760
    %v164 = vsub.f32 %v97, %v163
    %v165 = vand.u32 %v164, 4294901760
    %v166 = vsub.f32 %v164, %v165
    %v167 = vand.u32 %v166, 4294901760
    %168 = vmatmul.f32.gmra.mxu0 %v167
    %v169 = vpop.f32.mrf.mxu0
    %v170 = vadd.f32 %v73, %v169
    %v171 = vand.u32 %v100, 4294901760
    %v172 = vsub.f32 %v100, %v171
    %v173 = vand.u32 %v172, 4294901760
    %v174 = vsub.f32 %v172, %v173
    %v175 = vand.u32 %v174, 4294901760
    %176 = vmatmul.f32.gmra.mxu0 %v175
    %v177 = vpop.f32.mrf.mxu0
    %v178 = vadd.f32 %v78, %v177
    %179 = vdwg.mxu0
    %180 = vmatpush.msra.mxu0 0.0
    %181 = vmatpush.msra.mxu0 0.0
    %182 = vmatpush.msra.mxu0 0.0
    %183 = vmatpush.msra.mxu0 0.0
    %184 = vmatpush.msra.mxu0 0.0
    %185 = vmatpush.msra.mxu0 0.0
    %186 = vmatpush.msra.mxu0 0.0
    %187 = vmatpush.msra.mxu0 0.0
    %188 = vmatpush.msra.mxu0 0.0
    %189 = vmatpush.msra.mxu0 0.0
    %190 = vmatpush.msra.mxu0 0.0
    %191 = vmatpush.msra.mxu0 0.0
    %192 = vmatpush.msra.mxu0 0.0
    %193 = vmatpush.msra.mxu0 0.0
    %194 = vmatpush.msra.mxu0 0.0
    %v195 = vand.u32 %v104, 4294901760
    %v196 = vsub.f32 %v104, %v195
    %v197 = vand.u32 %v196, 4294901760
    %v198 = vsub.f32 %v196, %v197
    %v199 = vand.u32 %v198, 4294901760
    %200 = vmatpush.msra.mxu0 %v199
    %v201 = vand.u32 %v82, 4294901760
    %202 = vmatmul.f32.gmra.mxu0 %v201
    %v203 = vpop.f32.mrf.mxu0
    %v204 = vadd.f32 %v130, %v203
    %v205 = vand.u32 %v85, 4294901760
    %206 = vmatmul.f32.gmra.mxu0 %v205
    %v207 = vpop.f32.mrf.mxu0
    %v208 = vadd.f32 %v138, %v207
    %v209 = vand.u32 %v88, 4294901760
    %210 = vmatmul.f32.gmra.mxu0 %v209
    %v211 = vpop.f32.mrf.mxu0
    %v212 = vadd.f32 %v146, %v211
    %v213 = vand.u32 %v91, 4294901760
    %214 = vmatmul.f32.gmra.mxu0 %v213
    %v215 = vpop.f32.mrf.mxu0
    %v216 = vadd.f32 %v154, %v215
    %v217 = vand.u32 %v94, 4294901760
    %218 = vmatmul.f32.gmra.mxu0 %v217
    %v219 = vpop.f32.mrf.mxu0
    %v220 = vadd.f32 %v162, %v219
    %v221 = vand.u32 %v97, 4294901760
    %222 = vmatmul.f32.gmra.mxu0 %v221
    %v223 = vpop.f32.mrf.mxu0
    %v224 = vadd.f32 %v170, %v223
    %v225 = vand.u32 %v100, 4294901760
    %226 = vmatmul.f32.gmra.mxu0 %v225
    %v227 = vpop.f32.mrf.mxu0
    %v228 = vadd.f32 %v178, %v227
    %229 = vdwg.mxu0
    %230 = vmatpush.msra.mxu0 0.0
    %231 = vmatpush.msra.mxu0 0.0
    %232 = vmatpush.msra.mxu0 0.0
    %233 = vmatpush.msra.mxu0 0.0
    %234 = vmatpush.msra.mxu0 0.0
    %235 = vmatpush.msra.mxu0 0.0
    %236 = vmatpush.msra.mxu0 0.0
    %237 = vmatpush.msra.mxu0 0.0
    %238 = vmatpush.msra.mxu0 0.0
    %239 = vmatpush.msra.mxu0 0.0
    %240 = vmatpush.msra.mxu0 0.0
    %241 = vmatpush.msra.mxu0 0.0
    %242 = vmatpush.msra.mxu0 0.0
    %243 = vmatpush.msra.mxu0 0.0
    %244 = vmatpush.msra.mxu0 0.0
    %v245 = vand.u32 %v104, 4294901760
    %v246 = vsub.f32 %v104, %v245
    %247 = vmatpush.msra.mxu0 %v246
    %v248 = vand.u32 %v82, 4294901760
    %v249 = vsub.f32 %v82, %v248
    %250 = vmatmul.f32.gmra.mxu0 %v249
    %v251 = vpop.f32.mrf.mxu0
    %v252 = vadd.f32 %v204, %v251
    %v253 = vand.u32 %v85, 4294901760
    %v254 = vsub.f32 %v85, %v253
    %255 = vmatmul.f32.gmra.mxu0 %v254
    %v256 = vpop.f32.mrf.mxu0
    %v257 = vadd.f32 %v208, %v256
    %v258 = vand.u32 %v88, 4294901760
    %v259 = vsub.f32 %v88, %v258
    %260 = vmatmul.f32.gmra.mxu0 %v259
    %v261 = vpop.f32.mrf.mxu0
    %v262 = vadd.f32 %v212, %v261
    %v263 = vand.u32 %v91, 4294901760
    %v264 = vsub.f32 %v91, %v263
    %265 = vmatmul.f32.gmra.mxu0 %v264
    %v266 = vpop.f32.mrf.mxu0
    %v267 = vadd.f32 %v216, %v266
    %v268 = vand.u32 %v94, 4294901760
    %v269 = vsub.f32 %v94, %v268
    %270 = vmatmul.f32.gmra.mxu0 %v269
    %v271 = vpop.f32.mrf.mxu0
    %v272 = vadd.f32 %v220, %v271
    %v273 = vand.u32 %v97, 4294901760
    %v274 = vsub.f32 %v97, %v273
    %275 = vmatmul.f32.gmra.mxu0 %v274
    %v276 = vpop.f32.mrf.mxu0
    %v277 = vadd.f32 %v224, %v276
    %v278 = vand.u32 %v100, 4294901760
    %v279 = vsub.f32 %v100, %v278
    %280 = vmatmul.f32.gmra.mxu0 %v279
    %v281 = vpop.f32.mrf.mxu0
    %v282 = vadd.f32 %v228, %v281
    %283 = vdwg.mxu0
    %284 = vmatpush.msra.mxu0 0.0
    %285 = vmatpush.msra.mxu0 0.0
    %286 = vmatpush.msra.mxu0 0.0
    %287 = vmatpush.msra.mxu0 0.0
    %288 = vmatpush.msra.mxu0 0.0
    %289 = vmatpush.msra.mxu0 0.0
    %290 = vmatpush.msra.mxu0 0.0
    %291 = vmatpush.msra.mxu0 0.0
    %292 = vmatpush.msra.mxu0 0.0
    %293 = vmatpush.msra.mxu0 0.0
    %294 = vmatpush.msra.mxu0 0.0
    %295 = vmatpush.msra.mxu0 0.0
    %296 = vmatpush.msra.mxu0 0.0
    %297 = vmatpush.msra.mxu0 0.0
    %298 = vmatpush.msra.mxu0 0.0
    %v299 = vand.u32 %v104, 4294901760
    %300 = vmatpush.msra.mxu0 %v299
    %v301 = vand.u32 %v82, 4294901760
    %v302 = vsub.f32 %v82, %v301
    %v303 = vand.u32 %v302, 4294901760
    %304 = vmatmul.f32.gmra.mxu0 %v303
    %v305 = vpop.f32.mrf.mxu0
    %v306 = vadd.f32 %v252, %v305
    %v307 = vand.u32 %v85, 4294901760
    %v308 = vsub.f32 %v85, %v307
    %v309 = vand.u32 %v308, 4294901760
    %310 = vmatmul.f32.gmra.mxu0 %v309
    %v311 = vpop.f32.mrf.mxu0
    %v312 = vadd.f32 %v257, %v311
    %v313 = vand.u32 %v88, 4294901760
    %v314 = vsub.f32 %v88, %v313
    %v315 = vand.u32 %v314, 4294901760
    %316 = vmatmul.f32.gmra.mxu0 %v315
    %v317 = vpop.f32.mrf.mxu0
    %v318 = vadd.f32 %v262, %v317
    %v319 = vand.u32 %v91, 4294901760
    %v320 = vsub.f32 %v91, %v319
    %v321 = vand.u32 %v320, 4294901760
    %322 = vmatmul.f32.gmra.mxu0 %v321
    %v323 = vpop.f32.mrf.mxu0
    %v324 = vadd.f32 %v267, %v323
    %v325 = vand.u32 %v94, 4294901760
    %v326 = vsub.f32 %v94, %v325
    %v327 = vand.u32 %v326, 4294901760
    %328 = vmatmul.f32.gmra.mxu0 %v327
    %v329 = vpop.f32.mrf.mxu0
    %v330 = vadd.f32 %v272, %v329
    %v331 = vand.u32 %v97, 4294901760
    %v332 = vsub.f32 %v97, %v331
    %v333 = vand.u32 %v332, 4294901760
    %334 = vmatmul.f32.gmra.mxu0 %v333
    %v335 = vpop.f32.mrf.mxu0
    %v336 = vadd.f32 %v277, %v335
    %v337 = vand.u32 %v100, 4294901760
    %v338 = vsub.f32 %v100, %v337
    %v339 = vand.u32 %v338, 4294901760
    %340 = vmatmul.f32.gmra.mxu0 %v339
    %v341 = vpop.f32.mrf.mxu0
    %v342 = vadd.f32 %v282, %v341
    %343 = vdwg.mxu0
    %344 = vmatpush.msra.mxu0 0.0
    %345 = vmatpush.msra.mxu0 0.0
    %346 = vmatpush.msra.mxu0 0.0
    %347 = vmatpush.msra.mxu0 0.0
    %348 = vmatpush.msra.mxu0 0.0
    %349 = vmatpush.msra.mxu0 0.0
    %350 = vmatpush.msra.mxu0 0.0
    %351 = vmatpush.msra.mxu0 0.0
    %352 = vmatpush.msra.mxu0 0.0
    %353 = vmatpush.msra.mxu0 0.0
    %354 = vmatpush.msra.mxu0 0.0
    %355 = vmatpush.msra.mxu0 0.0
    %356 = vmatpush.msra.mxu0 0.0
    %357 = vmatpush.msra.mxu0 0.0
    %358 = vmatpush.msra.mxu0 0.0
    %v359 = vand.u32 %v104, 4294901760
    %v360 = vsub.f32 %v104, %v359
    %v361 = vand.u32 %v360, 4294901760
    %362 = vmatpush.msra.mxu0 %v361
    %v363 = vand.u32 %v82, 4294901760
    %364 = vmatmul.f32.gmra.mxu0 %v363
    %v365 = vpop.f32.mrf.mxu0
    %v366 = vadd.f32 %v306, %v365
    %v367 = vand.u32 %v85, 4294901760
    %368 = vmatmul.f32.gmra.mxu0 %v367
    %v369 = vpop.f32.mrf.mxu0
    %v370 = vadd.f32 %v312, %v369
    %v371 = vand.u32 %v88, 4294901760
    %372 = vmatmul.f32.gmra.mxu0 %v371
    %v373 = vpop.f32.mrf.mxu0
    %v374 = vadd.f32 %v318, %v373
    %v375 = vand.u32 %v91, 4294901760
    %376 = vmatmul.f32.gmra.mxu0 %v375
    %v377 = vpop.f32.mrf.mxu0
    %v378 = vadd.f32 %v324, %v377
    %v379 = vand.u32 %v94, 4294901760
    %380 = vmatmul.f32.gmra.mxu0 %v379
    %v381 = vpop.f32.mrf.mxu0
    %v382 = vadd.f32 %v330, %v381
    %v383 = vand.u32 %v97, 4294901760
    %384 = vmatmul.f32.gmra.mxu0 %v383
    %v385 = vpop.f32.mrf.mxu0
    %v386 = vadd.f32 %v336, %v385
    %v387 = vand.u32 %v100, 4294901760
    %388 = vmatmul.f32.gmra.mxu0 %v387
    %v389 = vpop.f32.mrf.mxu0
    %v390 = vadd.f32 %v342, %v389
    %391 = vdwg.mxu0
    %392 = vmatpush.msra.mxu0 0.0
    %393 = vmatpush.msra.mxu0 0.0
    %394 = vmatpush.msra.mxu0 0.0
    %395 = vmatpush.msra.mxu0 0.0
    %396 = vmatpush.msra.mxu0 0.0
    %397 = vmatpush.msra.mxu0 0.0
    %398 = vmatpush.msra.mxu0 0.0
    %399 = vmatpush.msra.mxu0 0.0
    %400 = vmatpush.msra.mxu0 0.0
    %401 = vmatpush.msra.mxu0 0.0
    %402 = vmatpush.msra.mxu0 0.0
    %403 = vmatpush.msra.mxu0 0.0
    %404 = vmatpush.msra.mxu0 0.0
    %405 = vmatpush.msra.mxu0 0.0
    %406 = vmatpush.msra.mxu0 0.0
    %v407 = vand.u32 %v104, 4294901760
    %408 = vmatpush.msra.mxu0 %v407
    %v409 = vand.u32 %v82, 4294901760
    %410 = vmatmul.f32.gmra.mxu0 %v409
    %v411 = vpop.f32.mrf.mxu0
    %v412 = vadd.f32 %v366, %v411
    %v413 = vand.u32 %v85, 4294901760
    %414 = vmatmul.f32.gmra.mxu0 %v413
    %v415 = vpop.f32.mrf.mxu0
    %v416 = vadd.f32 %v370, %v415
    %v417 = vand.u32 %v88, 4294901760
    %418 = vmatmul.f32.gmra.mxu0 %v417
    %v419 = vpop.f32.mrf.mxu0
    %v420 = vadd.f32 %v374, %v419
    %v421 = vand.u32 %v91, 4294901760
    %422 = vmatmul.f32.gmra.mxu0 %v421
    %v423 = vpop.f32.mrf.mxu0
    %v424 = vadd.f32 %v378, %v423
    %v425 = vand.u32 %v94, 4294901760
    %426 = vmatmul.f32.gmra.mxu0 %v425
    %v427 = vpop.f32.mrf.mxu0
    %v428 = vadd.f32 %v382, %v427
    %v429 = vand.u32 %v97, 4294901760
    %430 = vmatmul.f32.gmra.mxu0 %v429
    %v431 = vpop.f32.mrf.mxu0
    %v432 = vadd.f32 %v386, %v431
    %v433 = vand.u32 %v100, 4294901760
    %434 = vmatmul.f32.gmra.mxu0 %v433
    %v435 = vpop.f32.mrf.mxu0
    %v436 = vadd.f32 %v390, %v435
    %437 = vdwg.mxu0
    %v438 = vtanh.pop %v412
    %v439 = vtanh.pop %v416
    %v440 = vtanh.pop %v420
    %v441 = vtanh.pop %v424
    %v442 = vtanh.pop %v428
    %v443 = vtanh.pop %v432
    %v444 = vtanh.pop %v436
    %446 = vset.pattern.permute.xlu0 0
    %447 = vperm.xlu0 %446, %v36
    %v448 = vpop.permute.xlu0 %447
    %451 = vset.pattern.permute.xlu0 0
    %452 = vperm.xlu0 %451, %v37
    %v453 = vpop.permute.xlu0 %452
    %456 = vset.pattern.permute.xlu0 0
    %457 = vperm.xlu0 %456, %v38
    %v458 = vpop.permute.xlu0 %457
    %461 = vset.pattern.permute.xlu0 0
    %462 = vperm.xlu0 %461, %v39
    %v463 = vpop.permute.xlu0 %462
    %466 = vset.pattern.permute.xlu0 0
    %467 = vperm.xlu0 %466, %v40
    %v468 = vpop.permute.xlu0 %467
    %471 = vset.pattern.permute.xlu0 0
    %472 = vperm.xlu0 %471, %v41
    %v473 = vpop.permute.xlu0 %472
    %476 = vset.pattern.permute.xlu0 0
    %477 = vperm.xlu0 %476, %v42
    %v478 = vpop.permute.xlu0 %477
    %v480 = vmul.f32 %v448, %v438
    %v481 = vmul.f32 %v453, %v439
    %v482 = vmul.f32 %v458, %v440
    %v483 = vmul.f32 %v463, %v441
    %v484 = vmul.f32 %v468, %v442
    %v485 = vmul.f32 %v473, %v443
    %v486 = vmul.f32 %v478, %v444
    %v487 = vadd.f32 %v480, %v481
    %v488 = vadd.f32 %v487, %v482
    %v489 = vadd.f32 %v488, %v483
    %v490 = vadd.f32 %v489, %v484
    %v491 = vadd.f32 %v490, %v485
    %vm492 = vcmask 1041408
    %v493 = vsel %vm492, %v486, 0.0
    %v494 = vadd.f32 %v491, %v493
    %v495 = vrot.slane %v494, 4
    %v496 = vadd.f32 %v494, %v495
    %v497 = vrot.slane %v496, 2
    %v498 = vadd.f32 %v496, %v497
    %v499 = vrot.slane %v498, 1
    %v500 = vadd.f32 %v498, %v499
    %v501 = vstv %s43
    %v502 = vadd.f32 %v500, %v501
    %v503 = vxor.u32 %v502, 2147483648
    %v504 = vmul.f32 %v503, 1.442695
    %v505 = vpow.pop %v504
    %v506 = vadd.f32 %v505, 1.0
    %v507 = vrcp.pop %v506
    %v508 = vmul.f32 %v506, %v507
    %v509 = vsub.f32 1.0, %v508
    %v510 = vmul.f32 %v507, %v509
    %v511 = vadd.f32 %v507, %v510
    %vm512 = vweird.f32 %v506
    %vm513 = vweird.f32 %v507
    %vm514 = vmor %vm512, %vm513
    %v515 = vsel %vm514, %v507, %v511
    %v516 = vand.u32 2147483647, %v506
    %vm517 = vcmp.eq.f32.partialorder %v516, 8.507059e+37
    %v518 = vand.u32 %v506, 2147483648
    %v519 = vor.u32 1.1754944e-38, %v518
    %v520 = vsel %vm517, %v519, %v515
    %v521 = vmul.f32 1.0, %v520
    %522 = vst [vmem:[#allocation3] sm:$0x1] %v521
    // Predicated region
    $region22: #{tpu_custom_call.1} parent=1 // pred_check
      _
    $region23: #{tpu_custom_call.1} parent=1 // pred_check_branch
      %524 = sbr.rel (0) target = $region25
    $region24: #{tpu_custom_call.1} parent=1 // pred_region
      %526 = vsyncadd [#allocation4], 0
      %s528 = sshll.u32 [#allocation3], 4
      %s529 = int_to_ptr.vmem [resolvable:$true] %s528
      %s530 = sshll.u32 %s5, 4
      %s531 = int_to_ptr.hbm [resolvable:$true] %s530
      %533 = dma.vmem_to_hbm [thread:$0]  %s529, 16, %s531, [#allocation4]
    $region25: #{tpu_custom_call.1} parent=1 // pred_fallthru
      _
    // Predicated region
    $region26: #{tpu_custom_call.1} parent=1 // pred_check
      _
    $region27: #{tpu_custom_call.1} parent=1 // pred_check_branch
      %535 = sbr.rel (0) target = $region29
    $region28: #{tpu_custom_call.1} parent=1 // pred_region
      %537 = dma.done [#allocation4], 16
    $region29: #{tpu_custom_call.1} parent=1 // pred_fallthru
      _
    %538 = vsyncpa [#allocation4], 1

</llo_original>
